<compile_context>
chip_gen: v5e
topology: v5e:2x2
jax: 0.10.0
libtpu: 0.0.40
codegen_flags: <defaults>
</compile_context>

<pallas_src>
import numpy as np
import jax
import jax.numpy as jnp
from jax.experimental import pallas as pl
from jax.experimental.pallas import tpu as pltpu


# ----------------------------- Pallas kernel --------------------------------

def _final_loss_crack_kernel(x3_ref, x4_ref, kt3_ref, kt4_ref, shift_ref,
                             w3_ref, w4_ref, c_ref, out_ref):
    # x3_ref: (N*C, h3*w3) already BN-scale-folded; kt*_ref: (h*w, HW)
    # Bilinear upsample (align_corners=True) == matmul with kron(Ry, Rx)^T,
    # then BN shift + ReLU.
    s3 = jnp.maximum(
        jnp.dot(x3_ref[...], kt3_ref[...], preferred_element_type=jnp.float32)
        + shift_ref[...], 0.0)                                      # (N*C, HW)
    s4 = jnp.maximum(
        jnp.dot(x4_ref[...], kt4_ref[...], preferred_element_type=jnp.float32)
        + shift_ref[...], 0.0)                                      # (N*C, HW)

    # fuse_conv + conv_f + DyReLU coefficients folded into one block-diagonal
    # projection: z[k*N + n] = a_k * y[n] + b_k  (y = conv_f(fuse_conv(...))).
    z = (jnp.dot(w3_ref[...], s3, preferred_element_type=jnp.float32)
         + jnp.dot(w4_ref[...], s4, preferred_element_type=jnp.float32)
         + c_ref[...])                                              # (2N, HW)

    n = out_ref.shape[0]
    out_ref[...] = jnp.maximum(z[:n, :], z[n:, :])                  # DyReLU: max_k


# ------------------------- host-side constant helpers ------------------------

def _interp_matrix_np(out_size, in_size):
    """Row-stochastic (out,in) NumPy matrix M s.t. M @ v == 1-D bilinear resize,
    align_corners=True (matches F.interpolate)."""
    if out_size == 1:
        src = np.zeros((1,), np.float32)
    else:
        src = np.arange(out_size, dtype=np.float32) * np.float32(
            (in_size - 1) / (out_size - 1))
    i0 = np.clip(np.floor(src).astype(np.int64), 0, in_size - 1)
    i1 = np.minimum(i0 + 1, in_size - 1)
    frac = (src - i0.astype(np.float32)).astype(np.float32)
    rows = np.arange(out_size)
    m = np.zeros((out_size, in_size), np.float32)
    m[rows, i0] += (1.0 - frac)
    m[rows, i1] += frac
    return m


# --------------------------------- wrapper -----------------------------------

def final_loss_crack_forward(params, loss1, loss2, loss3, loss4, W, H):
    """Mirrors FinalLoss_Crack.forward. loss1/loss2 (and conv_1/conv_2) are unused, as in PyTorch."""
    del loss1, loss2
    N, C, h3, w3 = loss3.shape
    _, _, h4, w4 = loss4.shape
    HW = H * W

    # Interpolation matrices built host-side (NumPy, static shapes -> constants).
    kt3 = jnp.asarray(
        np.kron(_interp_matrix_np(H, h3), _interp_matrix_np(W, w3)).T, jnp.float32)  # (h3*w3, HW)
    kt4 = jnp.asarray(
        np.kron(_interp_matrix_np(H, h4), _interp_matrix_np(W, w4)).T, jnp.float32)  # (h4*w4, HW)

    # BatchNorm (eval mode): scale folded into the small pre-upsample inputs,
    # shift kept for the kernel (applied before the ReLU).
    eps = 1e-5
    scale = params['bn_gamma'] / jnp.sqrt(params['bn_var'] + eps)   # (C,)
    shift = params['bn_beta'] - params['bn_mean'] * scale           # (C,)
    x3 = (loss3.astype(jnp.float32) * scale[None, :, None, None]).reshape(N * C, h3 * w3)
    x4 = (loss4.astype(jnp.float32) * scale[None, :, None, None]).reshape(N * C, h4 * w4)
    shift_t = jnp.tile(shift, N).reshape(N * C, 1).astype(jnp.float32)

    # conv_f folded into fuse_conv:
    #   y = (wcf@Wf3)@s3 + (wcf@Wf4)@s4 + (wcf@bfuse + bcf)
    w3p = params['convf_w'] @ params['fuse_w'][:, :C]               # (1, C)
    w4p = params['convf_w'] @ params['fuse_w'][:, C:]               # (1, C)
    bp = params['convf_w'] @ params['fuse_b'] + params['convf_b']   # (1,)

    # DyReLU-B (degenerate 1-channel: theta = fc2.bias) -> constant coefficients,
    # folded into the projection as two scaled copies of the block-diagonal weights.
    theta = 2.0 * jax.nn.sigmoid(params['dyrelu_fc2_b']) - 1.0
    coefs = (theta * jnp.array([1.0, 1.0, 0.5, 0.5], jnp.float32)
             + jnp.array([1.0, 0.0, 0.0, 0.0], jnp.float32))        # [a1, a2, b1, b2]
    a, b = coefs[:2], coefs[2:]

    eye = jnp.eye(N, dtype=jnp.float32)
    w3blk = jnp.kron(eye, w3p)                                      # (N, N*C), block-diag
    w4blk = jnp.kron(eye, w4p)
    w3big = jnp.concatenate([a[0] * w3blk, a[1] * w3blk], axis=0).astype(jnp.float32)  # (2N, N*C)
    w4big = jnp.concatenate([a[0] * w4blk, a[1] * w4blk], axis=0).astype(jnp.float32)
    cvec = jnp.repeat(a * bp + b, N).reshape(2 * N, 1).astype(jnp.float32)             # (2N, 1)

    vmem = pl.BlockSpec(memory_space=pltpu.MemorySpace.VMEM)
    out = pl.pallas_call(
        _final_loss_crack_kernel,
        out_shape=jax.ShapeDtypeStruct((N, HW), jnp.float32),
        in_specs=[vmem, vmem, vmem, vmem, vmem, vmem, vmem, vmem],
        out_specs=vmem,
    )(x3, x4, kt3, kt4, shift_t, w3big, w4big, cvec)

    return out.reshape(N, 1, H, W)


# --------------------------- pure-JAX reference ------------------------------

def _bilinear_align_corners(x, H, W):
    n, c, h, w = x.shape
    ys = (jnp.arange(H, dtype=jnp.float32) * (float(h - 1) / float(H - 1))) if H > 1 else jnp.zeros((1,), jnp.float32)
    xs = (jnp.arange(W, dtype=jnp.float32) * (float(w - 1) / float(W - 1))) if W > 1 else jnp.zeros((1,), jnp.float32)
    y0 = jnp.clip(jnp.floor(ys).astype(jnp.int32), 0, h - 1)
    y1 = jnp.minimum(y0 + 1, h - 1)
    x0 = jnp.clip(jnp.floor(xs).astype(jnp.int32), 0, w - 1)
    x1 = jnp.minimum(x0 + 1, w - 1)
    fy = (ys - y0.astype(jnp.float32))[None, None, :, None]
    fx = (xs - x0.astype(jnp.float32))[None, None, None, :]
    g = lambda yi, xi: x[:, :, yi, :][:, :, :, xi]
    top = g(y0, x0) * (1.0 - fx) + g(y0, x1) * fx
    bot = g(y1, x0) * (1.0 - fx) + g(y1, x1) * fx
    return top * (1.0 - fy) + bot * fy


def reference_forward(params, loss3, loss4, W, H):
    eps = 1e-5
    scale = params['bn_gamma'] / jnp.sqrt(params['bn_var'] + eps)
    shift = params['bn_beta'] - params['bn_mean'] * scale

    def bn_relu(x):
        return jnp.maximum(x * scale[None, :, None, None] + shift[None, :, None, None], 0.0)

    s3 = bn_relu(_bilinear_align_corners(loss3, H, W))
    s4 = bn_relu(_bilinear_align_corners(loss4, H, W))
    cat = jnp.concatenate([s3, s4], axis=1)
    fused = jnp.einsum('oc,nchw->nohw', params['fuse_w'], cat) + params['fuse_b'][None, :, None, None]
    y = jnp.einsum('oc,nchw->nohw', params['convf_w'], fused) + params['convf_b'][None, :, None, None]
    theta = 2.0 * jax.nn.sigmoid(params['dyrelu_fc2_b']) - 1.0
    coefs = theta * jnp.array([1.0, 1.0, 0.5, 0.5]) + jnp.array([1.0, 0.0, 0.0, 0.0])
    return jnp.maximum(y * coefs[0] + coefs[2], y * coefs[1] + coefs[3])


# --------------------------------- main --------------------------------------

if __name__ == "__main__":
    key = jax.random.PRNGKey(0)
    ks = jax.random.split(key, 14)

    N, C = 2, 64
    H, W = 16, 24           # target spatial size
    h3, w3 = 8, 12
    h4, w4 = 4, 6

    params = {
        'bn_gamma':      1.0 + 0.1 * jax.random.normal(ks[0], (C,), jnp.float32),
        'bn_beta':       0.1 * jax.random.normal(ks[1], (C,), jnp.float32),
        'bn_mean':       0.1 * jax.random.normal(ks[2], (C,), jnp.float32),
        'bn_var':        jnp.abs(jax.random.normal(ks[3], (C,), jnp.float32)) + 0.5,
        'fuse_w':        0.05 * jax.random.normal(ks[4], (C, 2 * C), jnp.float32),   # Conv2d(128->64, 1x1)
        'fuse_b':        0.05 * jax.random.normal(ks[5], (C,), jnp.float32),
        'convf_w':       0.05 * jax.random.normal(ks[6], (1, C), jnp.float32),       # Conv2d(64->1, 1x1)
        'convf_b':       0.05 * jax.random.normal(ks[7], (1,), jnp.float32),
        'dyrelu_fc2_b':  0.1 * jax.random.normal(ks[8], (4,), jnp.float32),
    }

    loss1 = jax.random.normal(ks[9],  (N, 256, H, W), jnp.float32)   # unused, as in PyTorch forward
    loss2 = jax.random.normal(ks[10], (N, 128, H, W), jnp.float32)   # unused, as in PyTorch forward
    loss3 = jax.random.normal(ks[11], (N, C, h3, w3), jnp.float32)
    loss4 = jax.random.normal(ks[12], (N, C, h4, w4), jnp.float32)

    out = final_loss_crack_forward(params, loss1, loss2, loss3, loss4, W, H)
    out = jax.block_until_ready(out)

    ref = jax.block_until_ready(reference_forward(params, loss3, loss4, W, H))
    np.testing.assert_allclose(np.asarray(out), np.asarray(ref), rtol=1e-4, atol=1e-4)
    assert out.shape == (N, 1, H, W)

    print("KERNEL_OK")
</pallas_src>

<mosaic_0001>
module attributes {stable_mosaic.version = 11 : i64} {
  func.func @_final_loss_crack_kernel(%arg0: memref<128x96xf32, #tpu.memory_space<vmem>>, %arg1: memref<128x24xf32, #tpu.memory_space<vmem>>, %arg2: memref<96x384xf32, #tpu.memory_space<vmem>>, %arg3: memref<24x384xf32, #tpu.memory_space<vmem>>, %arg4: memref<128x1xf32, #tpu.memory_space<vmem>>, %arg5: memref<4x128xf32, #tpu.memory_space<vmem>>, %arg6: memref<4x128xf32, #tpu.memory_space<vmem>>, %arg7: memref<4x1xf32, #tpu.memory_space<vmem>>, %arg8: memref<2x384xf32, #tpu.memory_space<vmem>>) attributes {dimension_semantics = [], scalar_prefetch = 0 : i64, scratch_operands = 0 : i64, tpu.core_type = #tpu.core_type<tc>} {
    %c0 = arith.constant 0 : index
    %c0_0 = arith.constant 0 : index
    %0 = vector.load %arg0[%c0, %c0_0] : memref<128x96xf32, #tpu.memory_space<vmem>>, vector<128x96xf32>
    %c0_1 = arith.constant 0 : index
    %c0_2 = arith.constant 0 : index
    %1 = vector.load %arg2[%c0_1, %c0_2] : memref<96x384xf32, #tpu.memory_space<vmem>>, vector<96x384xf32>
    %cst = arith.constant dense<0.000000e+00> : vector<128x384xf32>
    %2 = tpu.matmul %0, %1, %cst {dimension_numbers = #tpu.dot_dimension_numbers<[1], [0], [0], [1], [0, 0, 1, 1], [], []>} : vector<128x96xf32>, vector<96x384xf32>, vector<128x384xf32> -> vector<128x384xf32>
    %c0_3 = arith.constant 0 : index
    %c0_4 = arith.constant 0 : index
    %3 = vector.load %arg4[%c0_3, %c0_4] : memref<128x1xf32, #tpu.memory_space<vmem>>, vector<128x1xf32>
    %4 = vector.broadcast %3 : vector<128x1xf32> to vector<128x384xf32>
    %5 = arith.addf %2, %4 : vector<128x384xf32>
    %cst_5 = arith.constant 0.000000e+00 : f32
    %6 = vector.broadcast %cst_5 : f32 to vector<128x384xf32>
    %7 = arith.maximumf %5, %6 : vector<128x384xf32>
    %c0_6 = arith.constant 0 : index
    %c0_7 = arith.constant 0 : index
    %8 = vector.load %arg1[%c0_6, %c0_7] : memref<128x24xf32, #tpu.memory_space<vmem>>, vector<128x24xf32>
    %c0_8 = arith.constant 0 : index
    %c0_9 = arith.constant 0 : index
    %9 = vector.load %arg3[%c0_8, %c0_9] : memref<24x384xf32, #tpu.memory_space<vmem>>, vector<24x384xf32>
    %cst_10 = arith.constant dense<0.000000e+00> : vector<128x384xf32>
    %10 = tpu.matmul %8, %9, %cst_10 {dimension_numbers = #tpu.dot_dimension_numbers<[1], [0], [0], [1], [0, 0, 1, 1], [], []>} : vector<128x24xf32>, vector<24x384xf32>, vector<128x384xf32> -> vector<128x384xf32>
    %c0_11 = arith.constant 0 : index
    %c0_12 = arith.constant 0 : index
    %11 = vector.load %arg4[%c0_11, %c0_12] : memref<128x1xf32, #tpu.memory_space<vmem>>, vector<128x1xf32>
    %12 = vector.broadcast %11 : vector<128x1xf32> to vector<128x384xf32>
    %13 = arith.addf %10, %12 : vector<128x384xf32>
    %cst_13 = arith.constant 0.000000e+00 : f32
    %14 = vector.broadcast %cst_13 : f32 to vector<128x384xf32>
    %15 = arith.maximumf %13, %14 : vector<128x384xf32>
    %c0_14 = arith.constant 0 : index
    %c0_15 = arith.constant 0 : index
    %16 = vector.load %arg5[%c0_14, %c0_15] : memref<4x128xf32, #tpu.memory_space<vmem>>, vector<4x128xf32>
    %cst_16 = arith.constant dense<0.000000e+00> : vector<4x384xf32>
    %17 = tpu.matmul %16, %7, %cst_16 {dimension_numbers = #tpu.dot_dimension_numbers<[1], [0], [0], [1], [0, 0, 1, 1], [], []>} : vector<4x128xf32>, vector<128x384xf32>, vector<4x384xf32> -> vector<4x384xf32>
    %c0_17 = arith.constant 0 : index
    %c0_18 = arith.constant 0 : index
    %18 = vector.load %arg6[%c0_17, %c0_18] : memref<4x128xf32, #tpu.memory_space<vmem>>, vector<4x128xf32>
    %cst_19 = arith.constant dense<0.000000e+00> : vector<4x384xf32>
    %19 = tpu.matmul %18, %15, %cst_19 {dimension_numbers = #tpu.dot_dimension_numbers<[1], [0], [0], [1], [0, 0, 1, 1], [], []>} : vector<4x128xf32>, vector<128x384xf32>, vector<4x384xf32> -> vector<4x384xf32>
    %20 = arith.addf %17, %19 : vector<4x384xf32>
    %c0_20 = arith.constant 0 : index
    %c0_21 = arith.constant 0 : index
    %21 = vector.load %arg7[%c0_20, %c0_21] : memref<4x1xf32, #tpu.memory_space<vmem>>, vector<4x1xf32>
    %22 = vector.broadcast %21 : vector<4x1xf32> to vector<4x384xf32>
    %23 = arith.addf %20, %22 : vector<4x384xf32>
    %24 = vector.extract_strided_slice %23 {offsets = [0, 0], sizes = [2, 384], strides = [1, 1]} : vector<4x384xf32> to vector<2x384xf32>
    %25 = vector.extract_strided_slice %23 {offsets = [2, 0], sizes = [2, 384], strides = [1, 1]} : vector<4x384xf32> to vector<2x384xf32>
    %26 = arith.maximumf %24, %25 : vector<2x384xf32>
    %c0_22 = arith.constant 0 : index
    %c0_23 = arith.constant 0 : index
    %27 = vector.load %arg8[%c0_22, %c0_23] : memref<2x384xf32, #tpu.memory_space<vmem>>, vector<2x384xf32>
    tpu.vector_store %arg8[%c0_22, %c0_23], %26 {strides = array<i32>} : memref<2x384xf32, #tpu.memory_space<vmem>>, vector<2x384xf32>,
    return
  }
}

</mosaic_0001>

<llo_original>
// kernel: tpu_custom_call.1
$region0: #{tpu_custom_call.1}
  #allocation0 [shape = 'u32[]', space=smem, size = 0x4, offset = 0x4, fixed_abs, tag = 'smem constant byte address 0x4 - core index']
  #allocation1 [shape = 'u32[72,128]{1,0:T(1,128)}', space=vmem, size = 0x9000, scoped, tag = 'internal scratch']
  %s0 = inlined_call_operand.vmem [shape: f32[128,96], index: 0, kind: input, shape index: {}]
  %s1 = inlined_call_operand.vmem [shape: f32[128,24], index: 1, kind: input, shape index: {}]
  %s2 = inlined_call_operand.vmem [shape: f32[96,384], index: 2, kind: input, shape index: {}]
  %s3 = inlined_call_operand.vmem [shape: f32[24,384], index: 3, kind: input, shape index: {}]
  %s4 = inlined_call_operand.vmem [shape: f32[128,1], index: 4, kind: input, shape index: {}]
  %s5 = inlined_call_operand.vmem [shape: f32[4,128], index: 5, kind: input, shape index: {}]
  %s6 = inlined_call_operand.vmem [shape: f32[4,128], index: 6, kind: input, shape index: {}]
  %s7 = inlined_call_operand.vmem [shape: f32[4,1], index: 7, kind: input, shape index: {}]
  %s8 = inlined_call_operand.hbm [shape: f32[2,384], index: 8, kind: output, shape index: {}]
  %s9 = sld [smem:[#allocation0]]
  $region42: #{tpu_custom_call.1} parent=0
    _
  %s11 = ssub.s32 1, %s9
  %s12 = scalar_select 0, %s11, %s9
  $region1: #{tpu_custom_call.1} parent=0
    #allocation2 [shape = 'u8[3072]{0}', space=vmem, size = 0xc00, scoped, tag = 'output window, operand 0, single buffered']
    #allocation3 [shape = 's32[1]{0}', space=sflag, size = 0x4, scoped, tag = 'scoped memory for tpu_custom_call.1']
    %13 = vsyncpa [#allocation3], 0
    // Predicated region
    $region2: #{tpu_custom_call.1} parent=1 // pred_check
      _
    $region3: #{tpu_custom_call.1} parent=1 // pred_check_branch
      %15 = sbr.rel (0) target = $region5
    $region4: #{tpu_custom_call.1} parent=1 // pred_region
      _
    $region5: #{tpu_custom_call.1} parent=1 // pred_fallthru
      _
    // Predicated region
    $region6: #{tpu_custom_call.1} parent=1 // pred_check
      _
    $region7: #{tpu_custom_call.1} parent=1 // pred_check_branch
      %17 = sbr.rel (0) target = $region9
    $region8: #{tpu_custom_call.1} parent=1 // pred_region
      _
    $region9: #{tpu_custom_call.1} parent=1 // pred_fallthru
      _
    // Predicated region
    $region10: #{tpu_custom_call.1} parent=1 // pred_check
      _
    $region11: #{tpu_custom_call.1} parent=1 // pred_check_branch
      %19 = sbr.rel (0) target = $region13
    $region12: #{tpu_custom_call.1} parent=1 // pred_region
      _
    $region13: #{tpu_custom_call.1} parent=1 // pred_fallthru
      _
    // Predicated region
    $region14: #{tpu_custom_call.1} parent=1 // pred_check
      _
    $region15: #{tpu_custom_call.1} parent=1 // pred_check_branch
      %21 = sbr.rel (0) target = $region17
    $region16: #{tpu_custom_call.1} parent=1 // pred_region
      _
    $region17: #{tpu_custom_call.1} parent=1 // pred_fallthru
      _
    // Predicated region
    $region18: #{tpu_custom_call.1} parent=1 // pred_check
      _
    $region19: #{tpu_custom_call.1} parent=1 // pred_check_branch
      %23 = sbr.rel (0) target = $region21
    $region20: #{tpu_custom_call.1} parent=1 // pred_region
      _
    $region21: #{tpu_custom_call.1} parent=1 // pred_fallthru
      _
    // Predicated region
    $region22: #{tpu_custom_call.1} parent=1 // pred_check
      _
    $region23: #{tpu_custom_call.1} parent=1 // pred_check_branch
      %25 = sbr.rel (0) target = $region25
    $region24: #{tpu_custom_call.1} parent=1 // pred_region
      _
    $region25: #{tpu_custom_call.1} parent=1 // pred_fallthru
      _
    // Predicated region
    $region26: #{tpu_custom_call.1} parent=1 // pred_check
      _
    $region27: #{tpu_custom_call.1} parent=1 // pred_check_branch
      %27 = sbr.rel (0) target = $region29
    $region28: #{tpu_custom_call.1} parent=1 // pred_region
      _
    $region29: #{tpu_custom_call.1} parent=1 // pred_fallthru
      _
    // Predicated region
    $region30: #{tpu_custom_call.1} parent=1 // pred_check
      _
    $region31: #{tpu_custom_call.1} parent=1 // pred_check_branch
      %29 = sbr.rel (0) target = $region33
    $region32: #{tpu_custom_call.1} parent=1 // pred_region
      _
    $region33: #{tpu_custom_call.1} parent=1 // pred_fallthru
      _
    %v30 = vld [vmem:[%s0] sm:$0xff]
    %v31 = vld [vmem:[%s0 + $0x8] sm:$0xff]
    %v32 = vld [vmem:[%s0 + $0x10] sm:$0xff]
    %v33 = vld [vmem:[%s0 + $0x18] sm:$0xff]
    %v34 = vld [vmem:[%s0 + $0x20] sm:$0xff]
    %v35 = vld [vmem:[%s0 + $0x28] sm:$0xff]
    %v36 = vld [vmem:[%s0 + $0x30] sm:$0xff]
    %v37 = vld [vmem:[%s0 + $0x38] sm:$0xff]
    %v38 = vld [vmem:[%s0 + $0x40] sm:$0xff]
    %v39 = vld [vmem:[%s0 + $0x48] sm:$0xff]
    %v40 = vld [vmem:[%s0 + $0x50] sm:$0xff]
    %v41 = vld [vmem:[%s0 + $0x58] sm:$0xff]
    %v42 = vld [vmem:[%s0 + $0x60] sm:$0xff]
    %v43 = vld [vmem:[%s0 + $0x68] sm:$0xff]
    %v44 = vld [vmem:[%s0 + $0x70] sm:$0xff]
    %v45 = vld [vmem:[%s0 + $0x78] sm:$0xff]
    %v46 = vld [vmem:[%s2] sm:$0xff]
    %v47 = vld [vmem:[%s2 + $0x8] sm:$0xff]
    %v48 = vld [vmem:[%s2 + $0x10] sm:$0xff]
    %v49 = vld [vmem:[%s2 + $0x18] sm:$0xff]
    %v50 = vld [vmem:[%s2 + $0x20] sm:$0xff]
    %v51 = vld [vmem:[%s2 + $0x28] sm:$0xff]
    %v52 = vld [vmem:[%s2 + $0x30] sm:$0xff]
    %v53 = vld [vmem:[%s2 + $0x38] sm:$0xff]
    %v54 = vld [vmem:[%s2 + $0x40] sm:$0xff]
    %v55 = vld [vmem:[%s2 + $0x48] sm:$0xff]
    %v56 = vld [vmem:[%s2 + $0x50] sm:$0xff]
    %v57 = vld [vmem:[%s2 + $0x58] sm:$0xff]
    %v58 = vld [vmem:[%s2 + $0x60] sm:$0xff]
    %v59 = vld [vmem:[%s2 + $0x68] sm:$0xff]
    %v60 = vld [vmem:[%s2 + $0x70] sm:$0xff]
    %v61 = vld [vmem:[%s2 + $0x78] sm:$0xff]
    %v62 = vld [vmem:[%s2 + $0x80] sm:$0xff]
    %v63 = vld [vmem:[%s2 + $0x88] sm:$0xff]
    %v64 = vld [vmem:[%s2 + $0x90] sm:$0xff]
    %v65 = vld [vmem:[%s2 + $0x98] sm:$0xff]
    %v66 = vld [vmem:[%s2 + $0xa0] sm:$0xff]
    %v67 = vld [vmem:[%s2 + $0xa8] sm:$0xff]
    %v68 = vld [vmem:[%s2 + $0xb0] sm:$0xff]
    %v69 = vld [vmem:[%s2 + $0xb8] sm:$0xff]
    %v70 = vld [vmem:[%s2 + $0xc0] sm:$0xff]
    %v71 = vld [vmem:[%s2 + $0xc8] sm:$0xff]
    %v72 = vld [vmem:[%s2 + $0xd0] sm:$0xff]
    %v73 = vld [vmem:[%s2 + $0xd8] sm:$0xff]
    %v74 = vld [vmem:[%s2 + $0xe0] sm:$0xff]
    %v75 = vld [vmem:[%s2 + $0xe8] sm:$0xff]
    %v76 = vld [vmem:[%s2 + $0xf0] sm:$0xff]
    %v77 = vld [vmem:[%s2 + $0xf8] sm:$0xff]
    %v78 = vld [vmem:[%s2 + $0x100] sm:$0xff]
    %v79 = vld [vmem:[%s2 + $0x108] sm:$0xff]
    %v80 = vld [vmem:[%s2 + $0x110] sm:$0xff]
    %v81 = vld [vmem:[%s2 + $0x118] sm:$0xff]
    %v82 = vld [vmem:[%s4] sm:$0xff]
    %v83 = vld [vmem:[%s4 + $0x8] sm:$0xff]
    %v84 = vld [vmem:[%s4 + $0x10] sm:$0xff]
    %v85 = vld [vmem:[%s4 + $0x18] sm:$0xff]
    %v86 = vld [vmem:[%s4 + $0x20] sm:$0xff]
    %v87 = vld [vmem:[%s4 + $0x28] sm:$0xff]
    %v88 = vld [vmem:[%s4 + $0x30] sm:$0xff]
    %v89 = vld [vmem:[%s4 + $0x38] sm:$0xff]
    %v90 = vld [vmem:[%s4 + $0x40] sm:$0xff]
    %v91 = vld [vmem:[%s4 + $0x48] sm:$0xff]
    %v92 = vld [vmem:[%s4 + $0x50] sm:$0xff]
    %v93 = vld [vmem:[%s4 + $0x58] sm:$0xff]
    %v94 = vld [vmem:[%s4 + $0x60] sm:$0xff]
    %v95 = vld [vmem:[%s4 + $0x68] sm:$0xff]
    %v96 = vld [vmem:[%s4 + $0x70] sm:$0xff]
    %v97 = vld [vmem:[%s4 + $0x78] sm:$0xff]
    %99 = vset.pattern.permute.xlu0 0
    %100 = vperm.xlu0 %99, %v82
    %v101 = vpop.permute.xlu0 %100
    %104 = vset.pattern.permute.xlu0 0
    %105 = vperm.xlu0 %104, %v83
    %v106 = vpop.permute.xlu0 %105
    %109 = vset.pattern.permute.xlu0 0
    %110 = vperm.xlu0 %109, %v84
    %v111 = vpop.permute.xlu0 %110
    %114 = vset.pattern.permute.xlu0 0
    %115 = vperm.xlu0 %114, %v85
    %v116 = vpop.permute.xlu0 %115
    %119 = vset.pattern.permute.xlu0 0
    %120 = vperm.xlu0 %119, %v86
    %v121 = vpop.permute.xlu0 %120
    %124 = vset.pattern.permute.xlu0 0
    %125 = vperm.xlu0 %124, %v87
    %v126 = vpop.permute.xlu0 %125
    %129 = vset.pattern.permute.xlu0 0
    %130 = vperm.xlu0 %129, %v88
    %v131 = vpop.permute.xlu0 %130
    %134 = vset.pattern.permute.xlu0 0
    %135 = vperm.xlu0 %134, %v89
    %v136 = vpop.permute.xlu0 %135
    %139 = vset.pattern.permute.xlu0 0
    %140 = vperm.xlu0 %139, %v90
    %v141 = vpop.permute.xlu0 %140
    %144 = vset.pattern.permute.xlu0 0
    %145 = vperm.xlu0 %144, %v91
    %v146 = vpop.permute.xlu0 %145
    %149 = vset.pattern.permute.xlu0 0
    %150 = vperm.xlu0 %149, %v92
    %v151 = vpop.permute.xlu0 %150
    %154 = vset.pattern.permute.xlu0 0
    %155 = vperm.xlu0 %154, %v93
    %v156 = vpop.permute.xlu0 %155
    %159 = vset.pattern.permute.xlu0 0
    %160 = vperm.xlu0 %159, %v94
    %v161 = vpop.permute.xlu0 %160
    %164 = vset.pattern.permute.xlu0 0
    %165 = vperm.xlu0 %164, %v95
    %v166 = vpop.permute.xlu0 %165
    %169 = vset.pattern.permute.xlu0 0
    %170 = vperm.xlu0 %169, %v96
    %v171 = vpop.permute.xlu0 %170
    %174 = vset.pattern.permute.xlu0 0
    %175 = vperm.xlu0 %174, %v97
    %v176 = vpop.permute.xlu0 %175
    %vm178 = vcmask 785408
    %v180 = vsel %vm178, %v30, 0
    %v183 = vsel %vm178, %v31, 0
    %v186 = vsel %vm178, %v32, 0
    %v189 = vsel %vm178, %v33, 0
    %v192 = vsel %vm178, %v34, 0
    %v195 = vsel %vm178, %v35, 0
    %v198 = vsel %vm178, %v36, 0
    %v201 = vsel %vm178, %v37, 0
    %v204 = vsel %vm178, %v38, 0
    %v207 = vsel %vm178, %v39, 0
    %v210 = vsel %vm178, %v40, 0
    %v213 = vsel %vm178, %v41, 0
    %v216 = vsel %vm178, %v42, 0
    %v219 = vsel %vm178, %v43, 0
    %v222 = vsel %vm178, %v44, 0
    %v225 = vsel %vm178, %v45, 0
    %227 = vmatpush.msra.mxu0 0.0
    %228 = vmatpush.msra.mxu0 0.0
    %229 = vmatpush.msra.mxu0 0.0
    %230 = vmatpush.msra.mxu0 0.0
    %231 = vmatpush.msra.mxu0 %v79
    %232 = vmatpush.msra.mxu0 %v76
    %233 = vmatpush.msra.mxu0 %v73
    %234 = vmatpush.msra.mxu0 %v70
    %235 = vmatpush.msra.mxu0 %v67
    %236 = vmatpush.msra.mxu0 %v64
    %237 = vmatpush.msra.mxu0 %v61
    %238 = vmatpush.msra.mxu0 %v58
    %239 = vmatpush.msra.mxu0 %v55
    %240 = vmatpush.msra.mxu0 %v52
    %241 = vmatpush.msra.mxu0 %v49
    %242 = vmatpush.msra.mxu0 %v46
    %243 = vmatmul.f32.gmra.mxu0 %v180
    %v244 = vpop.f32.mrf.mxu0
    %v245 = vadd.f32 %v101, %v244
    %246 = vmatmul.f32.gmra.mxu0 %v183
    %v247 = vpop.f32.mrf.mxu0
    %v248 = vadd.f32 %v106, %v247
    %249 = vmatmul.f32.gmra.mxu0 %v186
    %v250 = vpop.f32.mrf.mxu0
    %v251 = vadd.f32 %v111, %v250
    %252 = vmatmul.f32.gmra.mxu0 %v189
    %v253 = vpop.f32.mrf.mxu0
    %v254 = vadd.f32 %v116, %v253
    %255 = vmatmul.f32.gmra.mxu0 %v192
    %v256 = vpop.f32.mrf.mxu0
    %v257 = vadd.f32 %v121, %v256
    %258 = vmatmul.f32.gmra.mxu0 %v195
    %v259 = vpop.f32.mrf.mxu0
    %v260 = vadd.f32 %v126, %v259
    %261 = vmatmul.f32.gmra.mxu0 %v198
    %v262 = vpop.f32.mrf.mxu0
    %v263 = vadd.f32 %v131, %v262
    %264 = vmatmul.f32.gmra.mxu0 %v201
    %v265 = vpop.f32.mrf.mxu0
    %v266 = vadd.f32 %v136, %v265
    %267 = vmatmul.f32.gmra.mxu0 %v204
    %v268 = vpop.f32.mrf.mxu0
    %v269 = vadd.f32 %v141, %v268
    %270 = vmatmul.f32.gmra.mxu0 %v207
    %v271 = vpop.f32.mrf.mxu0
    %v272 = vadd.f32 %v146, %v271
    %273 = vmatmul.f32.gmra.mxu0 %v210
    %v274 = vpop.f32.mrf.mxu0
    %v275 = vadd.f32 %v151, %v274
    %276 = vmatmul.f32.gmra.mxu0 %v213
    %v277 = vpop.f32.mrf.mxu0
    %v278 = vadd.f32 %v156, %v277
    %279 = vmatmul.f32.gmra.mxu0 %v216
    %v280 = vpop.f32.mrf.mxu0
    %v281 = vadd.f32 %v161, %v280
    %282 = vmatmul.f32.gmra.mxu0 %v219
    %v283 = vpop.f32.mrf.mxu0
    %v284 = vadd.f32 %v166, %v283
    %285 = vmatmul.f32.gmra.mxu0 %v222
    %v286 = vpop.f32.mrf.mxu0
    %v287 = vadd.f32 %v171, %v286
    %288 = vmatmul.f32.gmra.mxu0 %v225
    %v289 = vpop.f32.mrf.mxu0
    %v290 = vadd.f32 %v176, %v289
    %291 = vdwg.mxu0
    %292 = vmatpush.msra.mxu0 0.0
    %293 = vmatpush.msra.mxu0 0.0
    %294 = vmatpush.msra.mxu0 0.0
    %295 = vmatpush.msra.mxu0 0.0
    %296 = vmatpush.msra.mxu0 %v80
    %297 = vmatpush.msra.mxu0 %v77
    %298 = vmatpush.msra.mxu0 %v74
    %299 = vmatpush.msra.mxu0 %v71
    %300 = vmatpush.msra.mxu0 %v68
    %301 = vmatpush.msra.mxu0 %v65
    %302 = vmatpush.msra.mxu0 %v62
    %303 = vmatpush.msra.mxu0 %v59
    %304 = vmatpush.msra.mxu0 %v56
    %305 = vmatpush.msra.mxu0 %v53
    %306 = vmatpush.msra.mxu0 %v50
    %307 = vmatpush.msra.mxu0 %v47
    %308 = vmatmul.f32.gmra.mxu0 %v180
    %v309 = vpop.f32.mrf.mxu0
    %v310 = vadd.f32 %v101, %v309
    %311 = vmatmul.f32.gmra.mxu0 %v183
    %v312 = vpop.f32.mrf.mxu0
    %v313 = vadd.f32 %v106, %v312
    %314 = vmatmul.f32.gmra.mxu0 %v186
    %v315 = vpop.f32.mrf.mxu0
    %v316 = vadd.f32 %v111, %v315
    %317 = vmatmul.f32.gmra.mxu0 %v189
    %v318 = vpop.f32.mrf.mxu0
    %v319 = vadd.f32 %v116, %v318
    %320 = vmatmul.f32.gmra.mxu0 %v192
    %v321 = vpop.f32.mrf.mxu0
    %v322 = vadd.f32 %v121, %v321
    %323 = vmatmul.f32.gmra.mxu0 %v195
    %v324 = vpop.f32.mrf.mxu0
    %v325 = vadd.f32 %v126, %v324
    %326 = vmatmul.f32.gmra.mxu0 %v198
    %v327 = vpop.f32.mrf.mxu0
    %v328 = vadd.f32 %v131, %v327
    %329 = vmatmul.f32.gmra.mxu0 %v201
    %v330 = vpop.f32.mrf.mxu0
    %v331 = vadd.f32 %v136, %v330
    %332 = vmatmul.f32.gmra.mxu0 %v204
    %v333 = vpop.f32.mrf.mxu0
    %v334 = vadd.f32 %v141, %v333
    %335 = vmatmul.f32.gmra.mxu0 %v207
    %v336 = vpop.f32.mrf.mxu0
    %v337 = vadd.f32 %v146, %v336
    %338 = vmatmul.f32.gmra.mxu0 %v210
    %v339 = vpop.f32.mrf.mxu0
    %v340 = vadd.f32 %v151, %v339
    %341 = vmatmul.f32.gmra.mxu0 %v213
    %v342 = vpop.f32.mrf.mxu0
    %v343 = vadd.f32 %v156, %v342
    %344 = vmatmul.f32.gmra.mxu0 %v216
    %v345 = vpop.f32.mrf.mxu0
    %v346 = vadd.f32 %v161, %v345
    %347 = vmatmul.f32.gmra.mxu0 %v219
    %v348 = vpop.f32.mrf.mxu0
    %v349 = vadd.f32 %v166, %v348
    %350 = vmatmul.f32.gmra.mxu0 %v222
    %v351 = vpop.f32.mrf.mxu0
    %v352 = vadd.f32 %v171, %v351
    %353 = vmatmul.f32.gmra.mxu0 %v225
    %v354 = vpop.f32.mrf.mxu0
    %v355 = vadd.f32 %v176, %v354
    %356 = vdwg.mxu0
    %357 = vmatpush.msra.mxu0 0.0
    %358 = vmatpush.msra.mxu0 0.0
    %359 = vmatpush.msra.mxu0 0.0
    %360 = vmatpush.msra.mxu0 0.0
    %361 = vmatpush.msra.mxu0 %v81
    %362 = vmatpush.msra.mxu0 %v78
    %363 = vmatpush.msra.mxu0 %v75
    %364 = vmatpush.msra.mxu0 %v72
    %365 = vmatpush.msra.mxu0 %v69
    %366 = vmatpush.msra.mxu0 %v66
    %367 = vmatpush.msra.mxu0 %v63
    %368 = vmatpush.msra.mxu0 %v60
    %369 = vmatpush.msra.mxu0 %v57
    %370 = vmatpush.msra.mxu0 %v54
    %371 = vmatpush.msra.mxu0 %v51
    %372 = vmatpush.msra.mxu0 %v48
    %373 = vmatmul.f32.gmra.mxu0 %v180
    %v374 = vpop.f32.mrf.mxu0
    %v375 = vadd.f32 %v101, %v374
    %376 = vmatmul.f32.gmra.mxu0 %v183
    %v377 = vpop.f32.mrf.mxu0
    %v378 = vadd.f32 %v106, %v377
    %379 = vmatmul.f32.gmra.mxu0 %v186
    %v380 = vpop.f32.mrf.mxu0
    %v381 = vadd.f32 %v111, %v380
    %382 = vmatmul.f32.gmra.mxu0 %v189
    %v383 = vpop.f32.mrf.mxu0
    %v384 = vadd.f32 %v116, %v383
    %385 = vmatmul.f32.gmra.mxu0 %v192
    %v386 = vpop.f32.mrf.mxu0
    %v387 = vadd.f32 %v121, %v386
    %388 = vmatmul.f32.gmra.mxu0 %v195
    %v389 = vpop.f32.mrf.mxu0
    %v390 = vadd.f32 %v126, %v389
    %391 = vmatmul.f32.gmra.mxu0 %v198
    %v392 = vpop.f32.mrf.mxu0
    %v393 = vadd.f32 %v131, %v392
    %394 = vmatmul.f32.gmra.mxu0 %v201
    %v395 = vpop.f32.mrf.mxu0
    %v396 = vadd.f32 %v136, %v395
    %397 = vmatmul.f32.gmra.mxu0 %v204
    %v398 = vpop.f32.mrf.mxu0
    %v399 = vadd.f32 %v141, %v398
    %400 = vmatmul.f32.gmra.mxu0 %v207
    %v401 = vpop.f32.mrf.mxu0
    %v402 = vadd.f32 %v146, %v401
    %403 = vmatmul.f32.gmra.mxu0 %v210
    %v404 = vpop.f32.mrf.mxu0
    %v405 = vadd.f32 %v151, %v404
    %406 = vmatmul.f32.gmra.mxu0 %v213
    %v407 = vpop.f32.mrf.mxu0
    %v408 = vadd.f32 %v156, %v407
    %409 = vmatmul.f32.gmra.mxu0 %v216
    %v410 = vpop.f32.mrf.mxu0
    %v411 = vadd.f32 %v161, %v410
    %412 = vmatmul.f32.gmra.mxu0 %v219
    %v413 = vpop.f32.mrf.mxu0
    %v414 = vadd.f32 %v166, %v413
    %415 = vmatmul.f32.gmra.mxu0 %v222
    %v416 = vpop.f32.mrf.mxu0
    %v417 = vadd.f32 %v171, %v416
    %418 = vmatmul.f32.gmra.mxu0 %v225
    %v419 = vpop.f32.mrf.mxu0
    %v420 = vadd.f32 %v176, %v419
    %421 = vdwg.mxu0
    %v422 = vmax.f32 %v245, 0.0
    %v423 = vmax.f32 %v310, 0.0
    %v424 = vmax.f32 %v375, 0.0
    %v425 = vmax.f32 %v248, 0.0
    %v426 = vmax.f32 %v313, 0.0
    %v427 = vmax.f32 %v378, 0.0
    %v428 = vmax.f32 %v251, 0.0
    %v429 = vmax.f32 %v316, 0.0
    %v430 = vmax.f32 %v381, 0.0
    %v431 = vmax.f32 %v254, 0.0
    %v432 = vmax.f32 %v319, 0.0
    %v433 = vmax.f32 %v384, 0.0
    %v434 = vmax.f32 %v257, 0.0
    %v435 = vmax.f32 %v322, 0.0
    %v436 = vmax.f32 %v387, 0.0
    %v437 = vmax.f32 %v260, 0.0
    %v438 = vmax.f32 %v325, 0.0
    %v439 = vmax.f32 %v390, 0.0
    %v440 = vmax.f32 %v263, 0.0
    %v441 = vmax.f32 %v328, 0.0
    %v442 = vmax.f32 %v393, 0.0
    %v443 = vmax.f32 %v266, 0.0
    %v444 = vmax.f32 %v331, 0.0
    %v445 = vmax.f32 %v396, 0.0
    %v446 = vmax.f32 %v269, 0.0
    %v447 = vmax.f32 %v334, 0.0
    %v448 = vmax.f32 %v399, 0.0
    %v449 = vmax.f32 %v272, 0.0
    %v450 = vmax.f32 %v337, 0.0
    %v451 = vmax.f32 %v402, 0.0
    %v452 = vmax.f32 %v275, 0.0
    %v453 = vmax.f32 %v340, 0.0
    %v454 = vmax.f32 %v405, 0.0
    %v455 = vmax.f32 %v278, 0.0
    %v456 = vmax.f32 %v343, 0.0
    %v457 = vmax.f32 %v408, 0.0
    %v458 = vmax.f32 %v281, 0.0
    %v459 = vmax.f32 %v346, 0.0
    %v460 = vmax.f32 %v411, 0.0
    %v461 = vmax.f32 %v284, 0.0
    %v462 = vmax.f32 %v349, 0.0
    %v463 = vmax.f32 %v414, 0.0
    %v464 = vmax.f32 %v287, 0.0
    %v465 = vmax.f32 %v352, 0.0
    %v466 = vmax.f32 %v417, 0.0
    %v467 = vmax.f32 %v290, 0.0
    %v468 = vmax.f32 %v355, 0.0
    %v469 = vmax.f32 %v420, 0.0
    %v470 = vld [vmem:[%s1] sm:$0xff]
    %v471 = vld [vmem:[%s1 + $0x8] sm:$0xff]
    %v472 = vld [vmem:[%s1 + $0x10] sm:$0xff]
    %v473 = vld [vmem:[%s1 + $0x18] sm:$0xff]
    %v474 = vld [vmem:[%s1 + $0x20] sm:$0xff]
    %v475 = vld [vmem:[%s1 + $0x28] sm:$0xff]
    %v476 = vld [vmem:[%s1 + $0x30] sm:$0xff]
    %v477 = vld [vmem:[%s1 + $0x38] sm:$0xff]
    %v478 = vld [vmem:[%s1 + $0x40] sm:$0xff]
    %v479 = vld [vmem:[%s1 + $0x48] sm:$0xff]
    %v480 = vld [vmem:[%s1 + $0x50] sm:$0xff]
    %v481 = vld [vmem:[%s1 + $0x58] sm:$0xff]
    %v482 = vld [vmem:[%s1 + $0x60] sm:$0xff]
    %v483 = vld [vmem:[%s1 + $0x68] sm:$0xff]
    %v484 = vld [vmem:[%s1 + $0x70] sm:$0xff]
    %v485 = vld [vmem:[%s1 + $0x78] sm:$0xff]
    %v486 = vld [vmem:[%s3] sm:$0xff]
    %v487 = vld [vmem:[%s3 + $0x8] sm:$0xff]
    %v488 = vld [vmem:[%s3 + $0x10] sm:$0xff]
    %v489 = vld [vmem:[%s3 + $0x18] sm:$0xff]
    %v490 = vld [vmem:[%s3 + $0x20] sm:$0xff]
    %v491 = vld [vmem:[%s3 + $0x28] sm:$0xff]
    %v492 = vld [vmem:[%s3 + $0x30] sm:$0xff]
    %v493 = vld [vmem:[%s3 + $0x38] sm:$0xff]
    %v494 = vld [vmem:[%s3 + $0x40] sm:$0xff]
    %vm495 = vcmask 195584
    %v497 = vsel %vm495, %v470, 0
    %v500 = vsel %vm495, %v471, 0
    %v503 = vsel %vm495, %v472, 0
    %v506 = vsel %vm495, %v473, 0
    %v509 = vsel %vm495, %v474, 0
    %v512 = vsel %vm495, %v475, 0
    %v515 = vsel %vm495, %v476, 0
    %v518 = vsel %vm495, %v477, 0
    %v521 = vsel %vm495, %v478, 0
    %v524 = vsel %vm495, %v479, 0
    %v527 = vsel %vm495, %v480, 0
    %v530 = vsel %vm495, %v481, 0
    %v533 = vsel %vm495, %v482, 0
    %v536 = vsel %vm495, %v483, 0
    %v539 = vsel %vm495, %v484, 0
    %v542 = vsel %vm495, %v485, 0
    %544 = vmatpush.msra.mxu0 0.0
    %545 = vmatpush.msra.mxu0 0.0
    %546 = vmatpush.msra.mxu0 0.0
    %547 = vmatpush.msra.mxu0 0.0
    %548 = vmatpush.msra.mxu0 0.0
    %549 = vmatpush.msra.mxu0 0.0
    %550 = vmatpush.msra.mxu0 0.0
    %551 = vmatpush.msra.mxu0 0.0
    %552 = vmatpush.msra.mxu0 0.0
    %553 = vmatpush.msra.mxu0 0.0
    %554 = vmatpush.msra.mxu0 0.0
    %555 = vmatpush.msra.mxu0 0.0
    %556 = vmatpush.msra.mxu0 0.0
    %557 = vmatpush.msra.mxu0 %v492
    %558 = vmatpush.msra.mxu0 %v489
    %559 = vmatpush.msra.mxu0 %v486
    %560 = vmatmul.f32.gmra.mxu0 %v497
    %v561 = vpop.f32.mrf.mxu0
    %v562 = vadd.f32 %v101, %v561
    %563 = vmatmul.f32.gmra.mxu0 %v500
    %v564 = vpop.f32.mrf.mxu0
    %v565 = vadd.f32 %v106, %v564
    %566 = vmatmul.f32.gmra.mxu0 %v503
    %v567 = vpop.f32.mrf.mxu0
    %v568 = vadd.f32 %v111, %v567
    %569 = vmatmul.f32.gmra.mxu0 %v506
    %v570 = vpop.f32.mrf.mxu0
    %v571 = vadd.f32 %v116, %v570
    %572 = vmatmul.f32.gmra.mxu0 %v509
    %v573 = vpop.f32.mrf.mxu0
    %v574 = vadd.f32 %v121, %v573
    %575 = vmatmul.f32.gmra.mxu0 %v512
    %v576 = vpop.f32.mrf.mxu0
    %v577 = vadd.f32 %v126, %v576
    %578 = vmatmul.f32.gmra.mxu0 %v515
    %v579 = vpop.f32.mrf.mxu0
    %v580 = vadd.f32 %v131, %v579
    %581 = vmatmul.f32.gmra.mxu0 %v518
    %v582 = vpop.f32.mrf.mxu0
    %v583 = vadd.f32 %v136, %v582
    %584 = vmatmul.f32.gmra.mxu0 %v521
    %v585 = vpop.f32.mrf.mxu0
    %v586 = vadd.f32 %v141, %v585
    %587 = vmatmul.f32.gmra.mxu0 %v524
    %v588 = vpop.f32.mrf.mxu0
    %v589 = vadd.f32 %v146, %v588
    %590 = vmatmul.f32.gmra.mxu0 %v527
    %v591 = vpop.f32.mrf.mxu0
    %v592 = vadd.f32 %v151, %v591
    %593 = vmatmul.f32.gmra.mxu0 %v530
    %v594 = vpop.f32.mrf.mxu0
    %v595 = vadd.f32 %v156, %v594
    %596 = vmatmul.f32.gmra.mxu0 %v533
    %v597 = vpop.f32.mrf.mxu0
    %v598 = vadd.f32 %v161, %v597
    %599 = vmatmul.f32.gmra.mxu0 %v536
    %v600 = vpop.f32.mrf.mxu0
    %v601 = vadd.f32 %v166, %v600
    %602 = vmatmul.f32.gmra.mxu0 %v539
    %v603 = vpop.f32.mrf.mxu0
    %v604 = vadd.f32 %v171, %v603
    %605 = vmatmul.f32.gmra.mxu0 %v542
    %v606 = vpop.f32.mrf.mxu0
    %v607 = vadd.f32 %v176, %v606
    %608 = vdwg.mxu0
    %609 = vmatpush.msra.mxu0 0.0
    %610 = vmatpush.msra.mxu0 0.0
    %611 = vmatpush.msra.mxu0 0.0
    %612 = vmatpush.msra.mxu0 0.0
    %613 = vmatpush.msra.mxu0 0.0
    %614 = vmatpush.msra.mxu0 0.0
    %615 = vmatpush.msra.mxu0 0.0
    %616 = vmatpush.msra.mxu0 0.0
    %617 = vmatpush.msra.mxu0 0.0
    %618 = vmatpush.msra.mxu0 0.0
    %619 = vmatpush.msra.mxu0 0.0
    %620 = vmatpush.msra.mxu0 0.0
    %621 = vmatpush.msra.mxu0 0.0
    %622 = vmatpush.msra.mxu0 %v493
    %623 = vmatpush.msra.mxu0 %v490
    %624 = vmatpush.msra.mxu0 %v487
    %625 = vmatmul.f32.gmra.mxu0 %v497
    %v626 = vpop.f32.mrf.mxu0
    %v627 = vadd.f32 %v101, %v626
    %628 = vmatmul.f32.gmra.mxu0 %v500
    %v629 = vpop.f32.mrf.mxu0
    %v630 = vadd.f32 %v106, %v629
    %631 = vmatmul.f32.gmra.mxu0 %v503
    %v632 = vpop.f32.mrf.mxu0
    %v633 = vadd.f32 %v111, %v632
    %634 = vmatmul.f32.gmra.mxu0 %v506
    %v635 = vpop.f32.mrf.mxu0
    %v636 = vadd.f32 %v116, %v635
    %637 = vmatmul.f32.gmra.mxu0 %v509
    %v638 = vpop.f32.mrf.mxu0
    %v639 = vadd.f32 %v121, %v638
    %640 = vmatmul.f32.gmra.mxu0 %v512
    %v641 = vpop.f32.mrf.mxu0
    %v642 = vadd.f32 %v126, %v641
    %643 = vmatmul.f32.gmra.mxu0 %v515
    %v644 = vpop.f32.mrf.mxu0
    %v645 = vadd.f32 %v131, %v644
    %646 = vmatmul.f32.gmra.mxu0 %v518
    %v647 = vpop.f32.mrf.mxu0
    %v648 = vadd.f32 %v136, %v647
    %649 = vmatmul.f32.gmra.mxu0 %v521
    %v650 = vpop.f32.mrf.mxu0
    %v651 = vadd.f32 %v141, %v650
    %652 = vmatmul.f32.gmra.mxu0 %v524
    %v653 = vpop.f32.mrf.mxu0
    %v654 = vadd.f32 %v146, %v653
    %655 = vmatmul.f32.gmra.mxu0 %v527
    %v656 = vpop.f32.mrf.mxu0
    %v657 = vadd.f32 %v151, %v656
    %658 = vmatmul.f32.gmra.mxu0 %v530
    %v659 = vpop.f32.mrf.mxu0
    %v660 = vadd.f32 %v156, %v659
    %661 = vmatmul.f32.gmra.mxu0 %v533
    %v662 = vpop.f32.mrf.mxu0
    %v663 = vadd.f32 %v161, %v662
    %664 = vmatmul.f32.gmra.mxu0 %v536
    %v665 = vpop.f32.mrf.mxu0
    %v666 = vadd.f32 %v166, %v665
    %667 = vmatmul.f32.gmra.mxu0 %v539
    %v668 = vpop.f32.mrf.mxu0
    %v669 = vadd.f32 %v171, %v668
    %670 = vmatmul.f32.gmra.mxu0 %v542
    %v671 = vpop.f32.mrf.mxu0
    %v672 = vadd.f32 %v176, %v671
    %673 = vdwg.mxu0
    %674 = vmatpush.msra.mxu0 0.0
    %675 = vmatpush.msra.mxu0 0.0
    %676 = vmatpush.msra.mxu0 0.0
    %677 = vmatpush.msra.mxu0 0.0
    %678 = vmatpush.msra.mxu0 0.0
    %679 = vmatpush.msra.mxu0 0.0
    %680 = vmatpush.msra.mxu0 0.0
    %681 = vmatpush.msra.mxu0 0.0
    %682 = vmatpush.msra.mxu0 0.0
    %683 = vmatpush.msra.mxu0 0.0
    %684 = vmatpush.msra.mxu0 0.0
    %685 = vmatpush.msra.mxu0 0.0
    %686 = vmatpush.msra.mxu0 0.0
    %687 = vmatpush.msra.mxu0 %v494
    %688 = vmatpush.msra.mxu0 %v491
    %689 = vmatpush.msra.mxu0 %v488
    %690 = vmatmul.f32.gmra.mxu0 %v497
    %v691 = vpop.f32.mrf.mxu0
    %v692 = vadd.f32 %v101, %v691
    %693 = vmatmul.f32.gmra.mxu0 %v500
    %v694 = vpop.f32.mrf.mxu0
    %v695 = vadd.f32 %v106, %v694
    %696 = vmatmul.f32.gmra.mxu0 %v503
    %v697 = vpop.f32.mrf.mxu0
    %v698 = vadd.f32 %v111, %v697
    %699 = vmatmul.f32.gmra.mxu0 %v506
    %v700 = vpop.f32.mrf.mxu0
    %v701 = vadd.f32 %v116, %v700
    %702 = vmatmul.f32.gmra.mxu0 %v509
    %v703 = vpop.f32.mrf.mxu0
    %v704 = vadd.f32 %v121, %v703
    %705 = vmatmul.f32.gmra.mxu0 %v512
    %v706 = vpop.f32.mrf.mxu0
    %v707 = vadd.f32 %v126, %v706
    %708 = vmatmul.f32.gmra.mxu0 %v515
    %v709 = vpop.f32.mrf.mxu0
    %v710 = vadd.f32 %v131, %v709
    %711 = vmatmul.f32.gmra.mxu0 %v518
    %v712 = vpop.f32.mrf.mxu0
    %v713 = vadd.f32 %v136, %v712
    %714 = vmatmul.f32.gmra.mxu0 %v521
    %v715 = vpop.f32.mrf.mxu0
    %v716 = vadd.f32 %v141, %v715
    %717 = vmatmul.f32.gmra.mxu0 %v524
    %v718 = vpop.f32.mrf.mxu0
    %v719 = vadd.f32 %v146, %v718
    %720 = vmatmul.f32.gmra.mxu0 %v527
    %v721 = vpop.f32.mrf.mxu0
    %v722 = vadd.f32 %v151, %v721
    %723 = vmatmul.f32.gmra.mxu0 %v530
    %v724 = vpop.f32.mrf.mxu0
    %v725 = vadd.f32 %v156, %v724
    %726 = vmatmul.f32.gmra.mxu0 %v533
    %v727 = vpop.f32.mrf.mxu0
    %v728 = vadd.f32 %v161, %v727
    %729 = vmatmul.f32.gmra.mxu0 %v536
    %v730 = vpop.f32.mrf.mxu0
    %v731 = vadd.f32 %v166, %v730
    %732 = vmatmul.f32.gmra.mxu0 %v539
    %v733 = vpop.f32.mrf.mxu0
    %v734 = vadd.f32 %v171, %v733
    %735 = vmatmul.f32.gmra.mxu0 %v542
    %v736 = vpop.f32.mrf.mxu0
    %v737 = vadd.f32 %v176, %v736
    %738 = vdwg.mxu0
    %v739 = vmax.f32 %v562, 0.0
    %v740 = vmax.f32 %v627, 0.0
    %v741 = vmax.f32 %v692, 0.0
    %v742 = vmax.f32 %v565, 0.0
    %v743 = vmax.f32 %v630, 0.0
    %v744 = vmax.f32 %v695, 0.0
    %v745 = vmax.f32 %v568, 0.0
    %v746 = vmax.f32 %v633, 0.0
    %v747 = vmax.f32 %v698, 0.0
    %v748 = vmax.f32 %v571, 0.0
    %v749 = vmax.f32 %v636, 0.0
    %v750 = vmax.f32 %v701, 0.0
    %v751 = vmax.f32 %v574, 0.0
    %v752 = vmax.f32 %v639, 0.0
    %v753 = vmax.f32 %v704, 0.0
    %v754 = vmax.f32 %v577, 0.0
    %v755 = vmax.f32 %v642, 0.0
    %v756 = vmax.f32 %v707, 0.0
    %v757 = vmax.f32 %v580, 0.0
    %v758 = vmax.f32 %v645, 0.0
    %v759 = vmax.f32 %v710, 0.0
    %v760 = vmax.f32 %v583, 0.0
    %v761 = vmax.f32 %v648, 0.0
    %v762 = vmax.f32 %v713, 0.0
    %v763 = vmax.f32 %v586, 0.0
    %v764 = vmax.f32 %v651, 0.0
    %v765 = vmax.f32 %v716, 0.0
    %v766 = vmax.f32 %v589, 0.0
    %v767 = vmax.f32 %v654, 0.0
    %v768 = vmax.f32 %v719, 0.0
    %v769 = vmax.f32 %v592, 0.0
    %v770 = vmax.f32 %v657, 0.0
    %v771 = vmax.f32 %v722, 0.0
    %v772 = vmax.f32 %v595, 0.0
    %v773 = vmax.f32 %v660, 0.0
    %v774 = vmax.f32 %v725, 0.0
    %v775 = vmax.f32 %v598, 0.0
    %v776 = vmax.f32 %v663, 0.0
    %v777 = vmax.f32 %v728, 0.0
    %v778 = vmax.f32 %v601, 0.0
    %v779 = vmax.f32 %v666, 0.0
    %v780 = vmax.f32 %v731, 0.0
    %v781 = vmax.f32 %v604, 0.0
    %v782 = vmax.f32 %v669, 0.0
    %v783 = vmax.f32 %v734, 0.0
    %v784 = vmax.f32 %v607, 0.0
    %v785 = vmax.f32 %v672, 0.0
    %v786 = vmax.f32 %v737, 0.0
    %v787 = vld [vmem:[%s5] sm:$0xf]
    %v788 = vld [vmem:[%s6] sm:$0xf]
    %789 = vmatpush.msra.mxu0 %v784
    %790 = vmatpush.msra.mxu0 %v781
    %791 = vmatpush.msra.mxu0 %v778
    %792 = vmatpush.msra.mxu0 %v775
    %793 = vmatpush.msra.mxu0 %v772
    %794 = vmatpush.msra.mxu0 %v769
    %795 = vmatpush.msra.mxu0 %v766
    %796 = vmatpush.msra.mxu0 %v763
    %797 = vmatpush.msra.mxu0 %v760
    %798 = vmatpush.msra.mxu0 %v757
    %799 = vmatpush.msra.mxu0 %v754
    %800 = vmatpush.msra.mxu0 %v751
    %801 = vmatpush.msra.mxu0 %v748
    %802 = vmatpush.msra.mxu0 %v745
    %803 = vmatpush.msra.mxu0 %v742
    %804 = vmatpush.msra.mxu0 %v739
    %805 = vmatmul.f32.gmra.mxu0 %v788
    %v806 = vpop.f32.mrf.mxu0
    %v807 = vadd.f32 0.0, %v806
    %808 = vdwg.mxu0
    %809 = vmatpush.msra.mxu0 %v785
    %810 = vmatpush.msra.mxu0 %v782
    %811 = vmatpush.msra.mxu0 %v779
    %812 = vmatpush.msra.mxu0 %v776
    %813 = vmatpush.msra.mxu0 %v773
    %814 = vmatpush.msra.mxu0 %v770
    %815 = vmatpush.msra.mxu0 %v767
    %816 = vmatpush.msra.mxu0 %v764
    %817 = vmatpush.msra.mxu0 %v761
    %818 = vmatpush.msra.mxu0 %v758
    %819 = vmatpush.msra.mxu0 %v755
    %820 = vmatpush.msra.mxu0 %v752
    %821 = vmatpush.msra.mxu0 %v749
    %822 = vmatpush.msra.mxu0 %v746
    %823 = vmatpush.msra.mxu0 %v743
    %824 = vmatpush.msra.mxu0 %v740
    %825 = vmatmul.f32.gmra.mxu0 %v788
    %v826 = vpop.f32.mrf.mxu0
    %v827 = vadd.f32 0.0, %v826
    %828 = vdwg.mxu0
    %829 = vmatpush.msra.mxu0 %v786
    %830 = vmatpush.msra.mxu0 %v783
    %831 = vmatpush.msra.mxu0 %v780
    %832 = vmatpush.msra.mxu0 %v777
    %833 = vmatpush.msra.mxu0 %v774
    %834 = vmatpush.msra.mxu0 %v771
    %835 = vmatpush.msra.mxu0 %v768
    %836 = vmatpush.msra.mxu0 %v765
    %837 = vmatpush.msra.mxu0 %v762
    %838 = vmatpush.msra.mxu0 %v759
    %839 = vmatpush.msra.mxu0 %v756
    %840 = vmatpush.msra.mxu0 %v753
    %841 = vmatpush.msra.mxu0 %v750
    %842 = vmatpush.msra.mxu0 %v747
    %843 = vmatpush.msra.mxu0 %v744
    %844 = vmatpush.msra.mxu0 %v741
    %845 = vmatmul.f32.gmra.mxu0 %v788
    %v846 = vpop.f32.mrf.mxu0
    %v847 = vadd.f32 0.0, %v846
    %848 = vdwg.mxu0
    %849 = vmatpush.msra.mxu0 %v467
    %850 = vmatpush.msra.mxu0 %v464
    %851 = vmatpush.msra.mxu0 %v461
    %852 = vmatpush.msra.mxu0 %v458
    %853 = vmatpush.msra.mxu0 %v455
    %854 = vmatpush.msra.mxu0 %v452
    %855 = vmatpush.msra.mxu0 %v449
    %856 = vmatpush.msra.mxu0 %v446
    %857 = vmatpush.msra.mxu0 %v443
    %858 = vmatpush.msra.mxu0 %v440
    %859 = vmatpush.msra.mxu0 %v437
    %860 = vmatpush.msra.mxu0 %v434
    %861 = vmatpush.msra.mxu0 %v431
    %862 = vmatpush.msra.mxu0 %v428
    %863 = vmatpush.msra.mxu0 %v425
    %864 = vmatpush.msra.mxu0 %v422
    %865 = vmatmul.f32.gmra.mxu0 %v787
    %v866 = vpop.f32.mrf.mxu0
    %v867 = vadd.f32 %v807, %v866
    %868 = vdwg.mxu0
    %869 = vmatpush.msra.mxu0 %v468
    %870 = vmatpush.msra.mxu0 %v465
    %871 = vmatpush.msra.mxu0 %v462
    %872 = vmatpush.msra.mxu0 %v459
    %873 = vmatpush.msra.mxu0 %v456
    %874 = vmatpush.msra.mxu0 %v453
    %875 = vmatpush.msra.mxu0 %v450
    %876 = vmatpush.msra.mxu0 %v447
    %877 = vmatpush.msra.mxu0 %v444
    %878 = vmatpush.msra.mxu0 %v441
    %879 = vmatpush.msra.mxu0 %v438
    %880 = vmatpush.msra.mxu0 %v435
    %881 = vmatpush.msra.mxu0 %v432
    %882 = vmatpush.msra.mxu0 %v429
    %883 = vmatpush.msra.mxu0 %v426
    %884 = vmatpush.msra.mxu0 %v423
    %885 = vmatmul.f32.gmra.mxu0 %v787
    %v886 = vpop.f32.mrf.mxu0
    %v887 = vadd.f32 %v827, %v886
    %888 = vdwg.mxu0
    %889 = vmatpush.msra.mxu0 %v469
    %890 = vmatpush.msra.mxu0 %v466
    %891 = vmatpush.msra.mxu0 %v463
    %892 = vmatpush.msra.mxu0 %v460
    %893 = vmatpush.msra.mxu0 %v457
    %894 = vmatpush.msra.mxu0 %v454
    %895 = vmatpush.msra.mxu0 %v451
    %896 = vmatpush.msra.mxu0 %v448
    %897 = vmatpush.msra.mxu0 %v445
    %898 = vmatpush.msra.mxu0 %v442
    %899 = vmatpush.msra.mxu0 %v439
    %900 = vmatpush.msra.mxu0 %v436
    %901 = vmatpush.msra.mxu0 %v433
    %902 = vmatpush.msra.mxu0 %v430
    %903 = vmatpush.msra.mxu0 %v427
    %904 = vmatpush.msra.mxu0 %v424
    %905 = vmatmul.f32.gmra.mxu0 %v787
    %v906 = vpop.f32.mrf.mxu0
    %v907 = vadd.f32 %v847, %v906
    %908 = vdwg.mxu0
    %v909 = vld [vmem:[%s7] sm:$0xf]
    %911 = vset.pattern.permute.xlu0 0
    %912 = vperm.xlu0 %911, %v909
    %v913 = vpop.permute.xlu0 %912
    %v915 = vadd.f32 %v867, %v913
    %v916 = vadd.f32 %v887, %v913
    %v917 = vadd.f32 %v907, %v913
    %v921 = vrot.slane %v915, 2
    %v922 = vrot.slane %v916, 2
    %v923 = vrot.slane %v917, 2
    %v927 = vmax.f32 %v915, %v921
    %v928 = vmax.f32 %v916, %v922
    %v929 = vmax.f32 %v917, %v923
    %v933 = vrot.slane %v928, 6
    %v934 = vrot.slane %v929, 4
    %vm935 = vcmask 1041408
    %v936 = vsel %vm935, %v927, %v933
    %vm937 = vcmask 1043456
    %v938 = vsel %vm937, %v936, %v934
    %940 = vst [vmem:[#allocation2] sm:$0x3f] %v938
    // Predicated region
    $region34: #{tpu_custom_call.1} parent=1 // pred_check
      _
    $region35: #{tpu_custom_call.1} parent=1 // pred_check_branch
      %942 = sbr.rel (0) target = $region37
    $region36: #{tpu_custom_call.1} parent=1 // pred_region
      %944 = vsyncadd [#allocation3], 0
      %s946 = sshll.u32 [#allocation2], 4
      %s947 = int_to_ptr.vmem [resolvable:$true] %s946
      %s948 = sshll.u32 %s8, 4
      %s949 = int_to_ptr.hbm [resolvable:$true] %s948
      %951 = dma.vmem_to_hbm [thread:$0]  %s947, 96, %s949, [#allocation3]
    $region37: #{tpu_custom_call.1} parent=1 // pred_fallthru
      _
    // Predicated region
    $region38: #{tpu_custom_call.1} parent=1 // pred_check
      _
    $region39: #{tpu_custom_call.1} parent=1 // pred_check_branch
      %953 = sbr.rel (0) target = $region41
    $region40: #{tpu_custom_call.1} parent=1 // pred_region
      %955 = dma.done [#allocation3], 96
    $region41: #{tpu_custom_call.1} parent=1 // pred_fallthru
      _
    %956 = vsyncpa [#allocation3], 1

</llo_original>
